<compile_context>
chip_gen: v5e
topology: v5e:2x2
jax: 0.10.0
libtpu: 0.0.40
codegen_flags: <defaults>
</compile_context>

<pallas_src>
import functools
import math

import jax
import jax.numpy as jnp
from jax.experimental import pallas as pl
from jax.experimental.pallas import tpu as pltpu


def _round_up(v, m):
    return (v + m - 1) // m * m


def _vmem_capacity_bytes():
    """Per-TensorCore VMEM capacity (generation-aware budget)."""
    try:
        info = pltpu.get_tpu_info()
        cap = getattr(info, "vmem_capacity_bytes", None)
        if cap:
            return int(cap)
    except Exception:
        pass
    return 128 * 2**20  # defensive fallback (v5e/v6e value)


def _resident_spec(block_shape, index_map):
    """BlockSpec for operands with a constant index_map (weights/biases).

    Single-buffered: the default double buffer would allocate a second,
    never-used copy of each weight (halves resident-weight VMEM)."""
    try:
        return pl.BlockSpec(block_shape, index_map, pipeline_mode=pl.Buffered(1))
    except (AttributeError, TypeError):  # older jax without pipeline_mode
        return pl.BlockSpec(block_shape, index_map)


def _gelu(h, approximate):
    if approximate:
        # tanh-approximate GELU: transcendental rides the EUP slot instead of
        # the ~20-op VALU erf polynomial (useful on v6e/v7x if VALU binds).
        return jax.nn.gelu(h, approximate=True)
    # Exact erf GELU == torch.nn.GELU() default (approximate='none').
    return 0.5 * h * (1.0 + jax.lax.erf(h * (1.0 / math.sqrt(2.0))))


def _ffn_resident_kernel(x_ref, w1_ref, b1_ref, w2_ref, b2_ref, o_ref, *,
                         compute_dtype, approximate_gelu):
    # In-kernel cast to the MXU compute dtype (VPU) -> no wrapper-side
    # pad+cast HBM pass on the activations.
    x = x_ref[...].astype(compute_dtype)
    h = jnp.dot(x, w1_ref[...], preferred_element_type=jnp.float32)
    h = h + b1_ref[...]                      # f32 bias add
    h = _gelu(h, approximate_gelu)           # f32 GELU
    out = jnp.dot(h.astype(compute_dtype), w2_ref[...],
                  preferred_element_type=jnp.float32)
    out = out + b2_ref[...]
    o_ref[...] = out.astype(o_ref.dtype)


def _ffn_ktiled_kernel(x_ref, w1_ref, b1_ref, w2_ref, b2_ref, o_ref, acc_ref, *,
                       compute_dtype, approximate_gelu):
    # Hidden axis is the inner ("arbitrary") grid dimension; accumulate the
    # second matmul in an f32 scratch and finalize on the last hidden step.
    h_idx = pl.program_id(1)

    @pl.when(h_idx == 0)
    def _():
        acc_ref[...] = jnp.zeros_like(acc_ref)

    x = x_ref[...].astype(compute_dtype)
    h = jnp.dot(x, w1_ref[...], preferred_element_type=jnp.float32)
    h = h + b1_ref[...]
    h = _gelu(h, approximate_gelu)
    acc_ref[...] += jnp.dot(h.astype(compute_dtype), w2_ref[...],
                            preferred_element_type=jnp.float32)

    @pl.when(h_idx == pl.num_programs(1) - 1)
    def _():
        o_ref[...] = (acc_ref[...] + b2_ref[...]).astype(o_ref.dtype)


def feed_forward(x, w1, b1, w2, b2, *, tm=256, compute_dtype=jnp.bfloat16,
                 approximate_gelu=False, hidden_tile=None):
    """x: (batch, seq, dim); w1: (dim, hidden); b1: (hidden,);
    w2: (hidden, dim); b2: (dim,). Returns (batch, seq, dim) in x.dtype.

    tm: row tile (v6e with spare VMEM can profitably use 512).
    hidden_tile: force the hidden-axis K-tiled path with this tile width."""
    batch, seq, dim = x.shape
    hidden = w1.shape[1]
    M = batch * seq
    out_dtype = x.dtype

    # Lane-dense padding on the feature axes: multiples of 128 -> unmasked vst
    # and 128-aligned MXU tiles.
    dim_p = _round_up(dim, 128)
    hid_p = _round_up(hidden, 128)

    # Row tile: multiple of 16 satisfies both bf16 (16,128) and f32 (8,128)
    # tiling; clamp for tiny inputs. No M padding — ragged last tile is masked.
    tm_eff = _round_up(max(16, min(tm, _round_up(M, 16))), 16)
    grid_m = pl.cdiv(M, tm_eff)

    # x stays in its input dtype; only pad the feature axis when needed (a
    # no-op for typical ViT dims that are already multiples of 128).
    x2d = x.reshape(M, dim)
    if dim_p != dim:
        x2d = jnp.pad(x2d, ((0, 0), (0, dim_p - dim)))

    # Parameters: pad + pre-cast once, outside the hot path. Biases stay f32.
    w1p = jnp.pad(w1, ((0, dim_p - dim), (0, hid_p - hidden))).astype(compute_dtype)
    w2p = jnp.pad(w2, ((0, hid_p - hidden), (0, dim_p - dim))).astype(compute_dtype)
    b1p = jnp.pad(b1, (0, hid_p - hidden)).reshape(1, hid_p).astype(jnp.float32)
    b2p = jnp.pad(b2, (0, dim_p - dim)).reshape(1, dim_p).astype(jnp.float32)

    xb = jnp.dtype(x2d.dtype).itemsize
    cb = jnp.dtype(compute_dtype).itemsize
    ob = jnp.dtype(out_dtype).itemsize

    # Per-TensorCore VMEM budget. On v7x the 2 TCs each hold their own copy of
    # the resident weights, so budget the per-core capacity with ~30% headroom
    # for compiler scratch. (v5e/v6e: 128 MiB -> ~89 MiB; v7x: 64 MiB -> ~45.)
    vmem_cap = _vmem_capacity_bytes()
    budget = int(0.70 * vmem_cap)

    # Footprint of the weight-resident scheme (weights single-buffered).
    resident_needed = (
        2 * tm_eff * dim_p * xb          # x tiles (double-buffered, input dtype)
        + 2 * tm_eff * dim_p * ob        # out tiles (double-buffered)
        + 2 * dim_p * hid_p * cb         # W1 + W2, resident, single-buffered
        + (hid_p + dim_p) * 4            # biases
        + tm_eff * hid_p * (4 + cb)      # f32 hidden + compute-dtype copy
        + tm_eff * dim_p * 4)            # f32 accumulator of the 2nd matmul

    use_ktiled = (hidden_tile is not None
                  or int(1.3 * resident_needed) > budget)

    if not use_ktiled:
        kernel = functools.partial(_ffn_resident_kernel,
                                   compute_dtype=compute_dtype,
                                   approximate_gelu=approximate_gelu)
        vmem_limit = int(min(budget, max(16 * 2**20, int(1.3 * resident_needed))))

        def _run_resident(single_buffer_weights):
            w_spec = (_resident_spec if single_buffer_weights
                      else (lambda shape, imap: pl.BlockSpec(shape, imap)))
            return pl.pallas_call(
                kernel,
                out_shape=jax.ShapeDtypeStruct((M, dim_p), out_dtype),
                grid_spec=pltpu.PrefetchScalarGridSpec(
                    num_scalar_prefetch=0,
                    grid=(grid_m,),
                    in_specs=[
                        pl.BlockSpec((tm_eff, dim_p), lambda i: (i, 0)),  # x tile
                        w_spec((dim_p, hid_p), lambda i: (0, 0)),         # W1
                        w_spec((1, hid_p), lambda i: (0, 0)),             # b1
                        w_spec((hid_p, dim_p), lambda i: (0, 0)),         # W2
                        w_spec((1, dim_p), lambda i: (0, 0)),             # b2
                    ],
                    out_specs=pl.BlockSpec((tm_eff, dim_p), lambda i: (i, 0)),
                ),
                compiler_params=pltpu.CompilerParams(
                    dimension_semantics=("parallel",),   # rows shard across TCs
                    vmem_limit_bytes=vmem_limit),
            )(x2d, w1p, b1p, w2p, b2p)

        try:
            out2d = _run_resident(True)
        except Exception:
            # pipeline_mode=Buffered(1) unsupported on this jax/libtpu: fall
            # back to default double-buffered resident weights (correct, just
            # uses 2x weight VMEM).
            out2d = _run_resident(False)
    else:
        # Hidden-axis K-tiling bounds resident weight VMEM to 2*dim_p*th*cb
        # regardless of hidden size (needed for big FFNs on v7x's 64 MiB).
        th = min(hid_p, _round_up(hidden_tile if hidden_tile else 512, 128))
        while hid_p % th != 0:      # exact division: no garbage in the accumulator
            th -= 128

        kernel = functools.partial(_ffn_ktiled_kernel,
                                   compute_dtype=compute_dtype,
                                   approximate_gelu=approximate_gelu)
        ktiled_needed = (
            2 * tm_eff * dim_p * xb
            + 2 * tm_eff * dim_p * ob
            + 2 * 2 * dim_p * th * cb     # streamed W1/W2 tiles (double-buffered)
            + 2 * (th + dim_p) * 4        # bias tiles
            + tm_eff * th * (4 + cb)      # f32 hidden chunk + compute-dtype copy
            + tm_eff * dim_p * 4)         # f32 accumulator scratch
        vmem_limit = int(min(budget, max(16 * 2**20, int(1.3 * ktiled_needed))))

        out2d = pl.pallas_call(
            kernel,
            out_shape=jax.ShapeDtypeStruct((M, dim_p), out_dtype),
            grid_spec=pltpu.PrefetchScalarGridSpec(
                num_scalar_prefetch=0,
                grid=(grid_m, hid_p // th),
                in_specs=[
                    pl.BlockSpec((tm_eff, dim_p), lambda i, h: (i, 0)),  # x tile
                    pl.BlockSpec((dim_p, th), lambda i, h: (0, h)),      # W1 slice
                    pl.BlockSpec((1, th), lambda i, h: (0, h)),          # b1 slice
                    pl.BlockSpec((th, dim_p), lambda i, h: (h, 0)),      # W2 slice
                    pl.BlockSpec((1, dim_p), lambda i, h: (0, 0)),       # b2
                ],
                out_specs=pl.BlockSpec((tm_eff, dim_p), lambda i, h: (i, 0)),
                scratch_shapes=[pltpu.VMEM((tm_eff, dim_p), jnp.float32)],
            ),
            compiler_params=pltpu.CompilerParams(
                dimension_semantics=("parallel", "arbitrary"),
                vmem_limit_bytes=vmem_limit),
        )(x2d, w1p, b1p, w2p, b2p)

    if dim_p != dim:
        out2d = out2d[:, :dim]
    return out2d.reshape(batch, seq, dim)


def reference_f32(x, w1, b1, w2, b2):
    h = jnp.dot(x, w1, preferred_element_type=jnp.float32) + b1
    h = 0.5 * h * (1.0 + jax.lax.erf(h / math.sqrt(2.0)))
    return jnp.dot(h, w2, preferred_element_type=jnp.float32) + b2


def reference_compute_dtype(x, w1, b1, w2, b2, cdt):
    # Emulates the kernel numerics: matmul inputs in cdt, f32 accumulate/epilogue.
    h = jnp.dot(x.astype(cdt), w1.astype(cdt),
                preferred_element_type=jnp.float32) + b1
    h = 0.5 * h * (1.0 + jax.lax.erf(h / math.sqrt(2.0)))
    return jnp.dot(h.astype(cdt), w2.astype(cdt),
                   preferred_element_type=jnp.float32) + b2


if __name__ == "__main__":
    # Small shapes consistent with the module: tokens of width `dim`,
    # hidden expansion `hidden_dim`.
    batch, seq, dim, hidden = 2, 8, 32, 64

    key = jax.random.PRNGKey(0)
    kx, k1, kb1, k2, kb2, k3, kb3, k4, kb4 = jax.random.split(key, 9)

    x = jax.random.normal(kx, (batch, seq, dim), dtype=jnp.float32)

    # Deterministic parameter init (PyTorch Linear-style uniform bounds).
    bound1 = 1.0 / math.sqrt(dim)
    w1 = jax.random.uniform(k1, (dim, hidden), jnp.float32, -bound1, bound1)
    b1 = jax.random.uniform(kb1, (hidden,), jnp.float32, -bound1, bound1)
    bound2 = 1.0 / math.sqrt(hidden)
    w2 = jax.random.uniform(k2, (hidden, dim), jnp.float32, -bound2, bound2)
    b2 = jax.random.uniform(kb2, (dim,), jnp.float32, -bound2, bound2)

    # Weight-resident path: bf16 MXU inputs + f32 epilogue (fast default), and
    # f32 end-to-end (exact parity with a torch f32 FFN).
    out_bf16 = jax.block_until_ready(feed_forward(x, w1, b1, w2, b2))
    out_f32 = jax.block_until_ready(
        feed_forward(x, w1, b1, w2, b2, compute_dtype=jnp.float32))

    ref = reference_f32(x, w1, b1, w2, b2)
    ref_bf16 = reference_compute_dtype(x, w1, b1, w2, b2, jnp.bfloat16)

    assert out_bf16.shape == (batch, seq, dim)
    assert out_f32.shape == (batch, seq, dim)
    # f32 kernel matches the f32 reference tightly.
    assert jnp.allclose(out_f32, ref, atol=1e-4, rtol=1e-4)
    # bf16 kernel matches a bf16-matmul reference tightly...
    assert jnp.allclose(out_bf16, ref_bf16, atol=1e-3, rtol=1e-3)
    # ...and the f32 reference within bf16 tolerance.
    assert jnp.allclose(out_bf16, ref, atol=5e-2, rtol=5e-2)

    # Hidden-axis K-tiled path (large-FFN / v7x fallback) forced via
    # hidden_tile so both code paths are exercised: hidden=256, th=128 -> 2
    # accumulation steps over the hidden axis.
    hidden_k = 256
    w1k = jax.random.uniform(k3, (dim, hidden_k), jnp.float32, -bound1, bound1)
    b1k = jax.random.uniform(kb3, (hidden_k,), jnp.float32, -bound1, bound1)
    bound2k = 1.0 / math.sqrt(hidden_k)
    w2k = jax.random.uniform(k4, (hidden_k, dim), jnp.float32, -bound2k, bound2k)
    b2k = jax.random.uniform(kb4, (dim,), jnp.float32, -bound2k, bound2k)

    out_kt = jax.block_until_ready(
        feed_forward(x, w1k, b1k, w2k, b2k,
                     compute_dtype=jnp.float32, hidden_tile=128))
    ref_kt = reference_f32(x, w1k, b1k, w2k, b2k)
    assert out_kt.shape == (batch, seq, dim)
    assert jnp.allclose(out_kt, ref_kt, atol=1e-4, rtol=1e-4)

    print("KERNEL_OK")
</pallas_src>

<mosaic_0001>
module attributes {stable_mosaic.version = 11 : i64} {
  func.func @_ffn_resident_kernel(%arg0: i32, %arg1: memref<16x128xf32, #tpu.memory_space<vmem>>, %arg2: memref<128x128xbf16, #tpu.memory_space<vmem>>, %arg3: memref<1x128xf32, #tpu.memory_space<vmem>>, %arg4: memref<128x128xbf16, #tpu.memory_space<vmem>>, %arg5: memref<1x128xf32, #tpu.memory_space<vmem>>, %arg6: memref<16x128xf32, #tpu.memory_space<vmem>>) attributes {dimension_semantics = [#tpu.dimension_semantics<parallel>], iteration_bounds = array<i64: 1>, scalar_prefetch = 0 : i64, scratch_operands = 0 : i64, tpu.core_type = #tpu.core_type<tc>, window_params = [{transform_indices = @transform_0, window_bounds = array<i64: 16, 128>}, {pipeline_mode = #tpu.pipeline_mode<synchronous>, transform_indices = @transform_1, window_bounds = array<i64: 128, 128>}, {pipeline_mode = #tpu.pipeline_mode<synchronous>, transform_indices = @transform_2, window_bounds = array<i64: 1, 128>}, {pipeline_mode = #tpu.pipeline_mode<synchronous>, transform_indices = @transform_3, window_bounds = array<i64: 128, 128>}, {pipeline_mode = #tpu.pipeline_mode<synchronous>, transform_indices = @transform_4, window_bounds = array<i64: 1, 128>}, {transform_indices = @transform_5, window_bounds = array<i64: 16, 128>}]} {
    %c0 = arith.constant 0 : index
    %c0_0 = arith.constant 0 : index
    %0 = vector.load %arg1[%c0, %c0_0] : memref<16x128xf32, #tpu.memory_space<vmem>>, vector<16x128xf32>
    %1 = arith.truncf %0 : vector<16x128xf32> to vector<16x128xbf16>
    %c0_1 = arith.constant 0 : index
    %c0_2 = arith.constant 0 : index
    %2 = vector.load %arg2[%c0_1, %c0_2] : memref<128x128xbf16, #tpu.memory_space<vmem>>, vector<128x128xbf16>
    %cst = arith.constant dense<0.000000e+00> : vector<16x128xf32>
    %3 = tpu.matmul %1, %2, %cst {dimension_numbers = #tpu.dot_dimension_numbers<[1], [0], [0], [1], [0, 0, 1, 1], [], []>} : vector<16x128xbf16>, vector<128x128xbf16>, vector<16x128xf32> -> vector<16x128xf32>
    %c0_3 = arith.constant 0 : index
    %c0_4 = arith.constant 0 : index
    %4 = vector.load %arg3[%c0_3, %c0_4] : memref<1x128xf32, #tpu.memory_space<vmem>>, vector<1x128xf32>
    %5 = vector.broadcast %4 : vector<1x128xf32> to vector<16x128xf32>
    %6 = arith.addf %3, %5 : vector<16x128xf32>
    %cst_5 = arith.constant 5.000000e-01 : f32
    %7 = vector.broadcast %cst_5 : f32 to vector<16x128xf32>
    %8 = arith.mulf %7, %6 : vector<16x128xf32>
    %cst_6 = arith.constant 0.707106769 : f32
    %9 = vector.broadcast %cst_6 : f32 to vector<16x128xf32>
    %10 = arith.mulf %6, %9 : vector<16x128xf32>
    %11 = math.erf %10 : vector<16x128xf32>
    %cst_7 = arith.constant 1.000000e+00 : f32
    %12 = vector.broadcast %cst_7 : f32 to vector<16x128xf32>
    %13 = arith.addf %12, %11 : vector<16x128xf32>
    %14 = arith.mulf %8, %13 : vector<16x128xf32>
    %15 = arith.truncf %14 : vector<16x128xf32> to vector<16x128xbf16>
    %c0_8 = arith.constant 0 : index
    %c0_9 = arith.constant 0 : index
    %16 = vector.load %arg4[%c0_8, %c0_9] : memref<128x128xbf16, #tpu.memory_space<vmem>>, vector<128x128xbf16>
    %cst_10 = arith.constant dense<0.000000e+00> : vector<16x128xf32>
    %17 = tpu.matmul %15, %16, %cst_10 {dimension_numbers = #tpu.dot_dimension_numbers<[1], [0], [0], [1], [0, 0, 1, 1], [], []>} : vector<16x128xbf16>, vector<128x128xbf16>, vector<16x128xf32> -> vector<16x128xf32>
    %c0_11 = arith.constant 0 : index
    %c0_12 = arith.constant 0 : index
    %18 = vector.load %arg5[%c0_11, %c0_12] : memref<1x128xf32, #tpu.memory_space<vmem>>, vector<1x128xf32>
    %19 = vector.broadcast %18 : vector<1x128xf32> to vector<16x128xf32>
    %20 = arith.addf %17, %19 : vector<16x128xf32>
    %c0_13 = arith.constant 0 : index
    %c0_14 = arith.constant 0 : index
    %21 = vector.load %arg6[%c0_13, %c0_14] : memref<16x128xf32, #tpu.memory_space<vmem>>, vector<16x128xf32>
    tpu.vector_store %arg6[%c0_13, %c0_14], %20 {strides = array<i32>} : memref<16x128xf32, #tpu.memory_space<vmem>>, vector<16x128xf32>,
    return
  }
  func.func @transform_0(%arg0: i32) -> (i32, i32) {
    %c0_i32 = arith.constant 0 : i32
    %c0_i32_0 = arith.constant 0 : i32
    return %arg0, %c0_i32 : i32, i32
  }
  func.func @transform_1(%arg0: i32) -> (i32, i32) {
    %c0_i32 = arith.constant 0 : i32
    %c0_i32_0 = arith.constant 0 : i32
    %c0_i32_1 = arith.constant 0 : i32
    return %c0_i32, %c0_i32_0 : i32, i32
  }
  func.func @transform_2(%arg0: i32) -> (i32, i32) {
    %c0_i32 = arith.constant 0 : i32
    %c0_i32_0 = arith.constant 0 : i32
    %c0_i32_1 = arith.constant 0 : i32
    return %c0_i32, %c0_i32_0 : i32, i32
  }
  func.func @transform_3(%arg0: i32) -> (i32, i32) {
    %c0_i32 = arith.constant 0 : i32
    %c0_i32_0 = arith.constant 0 : i32
    %c0_i32_1 = arith.constant 0 : i32
    return %c0_i32, %c0_i32_0 : i32, i32
  }
  func.func @transform_4(%arg0: i32) -> (i32, i32) {
    %c0_i32 = arith.constant 0 : i32
    %c0_i32_0 = arith.constant 0 : i32
    %c0_i32_1 = arith.constant 0 : i32
    return %c0_i32, %c0_i32_0 : i32, i32
  }
  func.func @transform_5(%arg0: i32) -> (i32, i32) {
    %c0_i32 = arith.constant 0 : i32
    %c0_i32_0 = arith.constant 0 : i32
    return %arg0, %c0_i32 : i32, i32
  }
}

module attributes {stable_mosaic.version = 11 : i64} {
  func.func @_ffn_resident_kernel(%arg0: i32, %arg1: memref<16x128xf32, #tpu.memory_space<vmem>>, %arg2: memref<128x128xbf16, #tpu.memory_space<vmem>>, %arg3: memref<1x128xf32, #tpu.memory_space<vmem>>, %arg4: memref<128x128xbf16, #tpu.memory_space<vmem>>, %arg5: memref<1x128xf32, #tpu.memory_space<vmem>>, %arg6: memref<16x128xf32, #tpu.memory_space<vmem>>) attributes {dimension_semantics = [#tpu.dimension_semantics<parallel>], iteration_bounds = array<i64: 1>, scalar_prefetch = 0 : i64, scratch_operands = 0 : i64, tpu.core_type = #tpu.core_type<tc>, window_params = [{transform_indices = @transform_0, window_bounds = array<i64: 16, 128>}, {pipeline_mode = #tpu.pipeline_mode<synchronous>, transform_indices = @transform_1, window_bounds = array<i64: 128, 128>}, {pipeline_mode = #tpu.pipeline_mode<synchronous>, transform_indices = @transform_2, window_bounds = array<i64: 1, 128>}, {pipeline_mode = #tpu.pipeline_mode<synchronous>, transform_indices = @transform_3, window_bounds = array<i64: 128, 128>}, {pipeline_mode = #tpu.pipeline_mode<synchronous>, transform_indices = @transform_4, window_bounds = array<i64: 1, 128>}, {transform_indices = @transform_5, window_bounds = array<i64: 16, 128>}]} {
    %c0 = arith.constant 0 : index
    %c0_0 = arith.constant 0 : index
    %0 = vector.load %arg1[%c0, %c0_0] : memref<16x128xf32, #tpu.memory_space<vmem>>, vector<16x128xf32>
    %1 = arith.truncf %0 : vector<16x128xf32> to vector<16x128xbf16>
    %c0_1 = arith.constant 0 : index
    %c0_2 = arith.constant 0 : index
    %2 = vector.load %arg2[%c0_1, %c0_2] : memref<128x128xbf16, #tpu.memory_space<vmem>>, vector<128x128xbf16>
    %cst = arith.constant dense<0.000000e+00> : vector<16x128xf32>
    %3 = tpu.matmul %1, %2, %cst {dimension_numbers = #tpu.dot_dimension_numbers<[1], [0], [0], [1], [0, 0, 1, 1], [], []>} : vector<16x128xbf16>, vector<128x128xbf16>, vector<16x128xf32> -> vector<16x128xf32>
    %c0_3 = arith.constant 0 : index
    %c0_4 = arith.constant 0 : index
    %4 = vector.load %arg3[%c0_3, %c0_4] : memref<1x128xf32, #tpu.memory_space<vmem>>, vector<1x128xf32>
    %5 = vector.broadcast %4 : vector<1x128xf32> to vector<16x128xf32>
    %6 = arith.addf %3, %5 : vector<16x128xf32>
    %cst_5 = arith.constant 5.000000e-01 : f32
    %7 = vector.broadcast %cst_5 : f32 to vector<16x128xf32>
    %8 = arith.mulf %7, %6 : vector<16x128xf32>
    %cst_6 = arith.constant 0.707106769 : f32
    %9 = vector.broadcast %cst_6 : f32 to vector<16x128xf32>
    %10 = arith.mulf %6, %9 : vector<16x128xf32>
    %11 = math.erf %10 : vector<16x128xf32>
    %cst_7 = arith.constant 1.000000e+00 : f32
    %12 = vector.broadcast %cst_7 : f32 to vector<16x128xf32>
    %13 = arith.addf %12, %11 : vector<16x128xf32>
    %14 = arith.mulf %8, %13 : vector<16x128xf32>
    %15 = arith.truncf %14 : vector<16x128xf32> to vector<16x128xbf16>
    %c0_8 = arith.constant 0 : index
    %c0_9 = arith.constant 0 : index
    %16 = vector.load %arg4[%c0_8, %c0_9] : memref<128x128xbf16, #tpu.memory_space<vmem>>, vector<128x128xbf16>
    %cst_10 = arith.constant dense<0.000000e+00> : vector<16x128xf32>
    %17 = tpu.matmul %15, %16, %cst_10 {dimension_numbers = #tpu.dot_dimension_numbers<[1], [0], [0], [1], [0, 0, 1, 1], [], []>} : vector<16x128xbf16>, vector<128x128xbf16>, vector<16x128xf32> -> vector<16x128xf32>
    %c0_11 = arith.constant 0 : index
    %c0_12 = arith.constant 0 : index
    %18 = vector.load %arg5[%c0_11, %c0_12] : memref<1x128xf32, #tpu.memory_space<vmem>>, vector<1x128xf32>
    %19 = vector.broadcast %18 : vector<1x128xf32> to vector<16x128xf32>
    %20 = arith.addf %17, %19 : vector<16x128xf32>
    %c0_13 = arith.constant 0 : index
    %c0_14 = arith.constant 0 : index
    %21 = vector.load %arg6[%c0_13, %c0_14] : memref<16x128xf32, #tpu.memory_space<vmem>>, vector<16x128xf32>
    tpu.vector_store %arg6[%c0_13, %c0_14], %20 {strides = array<i32>} : memref<16x128xf32, #tpu.memory_space<vmem>>, vector<16x128xf32>,
    return
  }
  func.func @transform_0(%arg0: i32) -> (i32, i32) {
    %c0_i32 = arith.constant 0 : i32
    %c0_i32_0 = arith.constant 0 : i32
    return %arg0, %c0_i32 : i32, i32
  }
  func.func @transform_1(%arg0: i32) -> (i32, i32) {
    %c0_i32 = arith.constant 0 : i32
    %c0_i32_0 = arith.constant 0 : i32
    %c0_i32_1 = arith.constant 0 : i32
    return %c0_i32, %c0_i32_0 : i32, i32
  }
  func.func @transform_2(%arg0: i32) -> (i32, i32) {
    %c0_i32 = arith.constant 0 : i32
    %c0_i32_0 = arith.constant 0 : i32
    %c0_i32_1 = arith.constant 0 : i32
    return %c0_i32, %c0_i32_0 : i32, i32
  }
  func.func @transform_3(%arg0: i32) -> (i32, i32) {
    %c0_i32 = arith.constant 0 : i32
    %c0_i32_0 = arith.constant 0 : i32
    %c0_i32_1 = arith.constant 0 : i32
    return %c0_i32, %c0_i32_0 : i32, i32
  }
  func.func @transform_4(%arg0: i32) -> (i32, i32) {
    %c0_i32 = arith.constant 0 : i32
    %c0_i32_0 = arith.constant 0 : i32
    %c0_i32_1 = arith.constant 0 : i32
    return %c0_i32, %c0_i32_0 : i32, i32
  }
  func.func @transform_5(%arg0: i32) -> (i32, i32) {
    %c0_i32 = arith.constant 0 : i32
    %c0_i32_0 = arith.constant 0 : i32
    return %arg0, %c0_i32 : i32, i32
  }
}

</mosaic_0001>

<llo_original>
// kernel: tpu_custom_call.1
$region0: #{tpu_custom_call.1}
  #allocation0 [shape = 'u32[]', space=smem, size = 0x4, offset = 0x4, fixed_abs, tag = 'smem constant byte address 0x4 - core index']
  #allocation1 [shape = 'u32[72,128]{1,0:T(1,128)}', space=vmem, size = 0x9000, scoped, tag = 'internal scratch']
  %s0 = inlined_call_operand.hbm [shape: f32[16,128], index: 0, kind: input, shape index: {}]
  %s1 = inlined_call_operand.hbm [shape: bf16[128,128], index: 1, kind: input, shape index: {}]
  %s2 = inlined_call_operand.vmem [shape: f32[1,128], index: 2, kind: input, shape index: {}]
  %s3 = inlined_call_operand.hbm [shape: bf16[128,128], index: 3, kind: input, shape index: {}]
  %s4 = inlined_call_operand.vmem [shape: f32[1,128], index: 4, kind: input, shape index: {}]
  %s5 = inlined_call_operand.hbm [shape: f32[16,128], index: 5, kind: output, shape index: {}]
  %s6 = sld [smem:[#allocation0]]
  $region42: #{tpu_custom_call.1} parent=0
    _
  %s8 = ssub.s32 1, %s6
  %s9 = scalar_select 0, %s8, %s6
  $region1: #{tpu_custom_call.1} parent=0
    #allocation2 [shape = 'u8[8192]{0}', space=vmem, size = 0x2000, scoped, tag = 'input window, operand 0, single buffered']
    #allocation3 [shape = 's32[1]{0}', space=sflag, size = 0x4, scoped, tag = 'scoped memory for tpu_custom_call.1']
    #allocation4 [shape = 's32[1]{0}', space=sflag, size = 0x4, scoped, tag = 'scoped memory for tpu_custom_call.1']
    #allocation5 [shape = 'u8[32768]{0}', space=vmem, size = 0x8000, scoped, tag = 'input window, operand 1, single buffered']
    #allocation6 [shape = 's32[1]{0}', space=sflag, size = 0x4, scoped, tag = 'scoped memory for tpu_custom_call.1']
    #allocation7 [shape = 'u8[32768]{0}', space=vmem, size = 0x8000, scoped, tag = 'input window, operand 3, single buffered']
    #allocation8 [shape = 'u8[8192]{0}', space=vmem, size = 0x2000, scoped, tag = 'output window, operand 0, single buffered']
    %10 = vsyncpa [#allocation3], 0
    %11 = vsyncpa [#allocation6], 0
    %12 = vsyncpa [#allocation4], 0
    // Predicated region
    $region2: #{tpu_custom_call.1} parent=1 // pred_check
      _
    $region3: #{tpu_custom_call.1} parent=1 // pred_check_branch
      %14 = sbr.rel (0) target = $region5
    $region4: #{tpu_custom_call.1} parent=1 // pred_region
      %16 = vsyncadd [#allocation3], 0
      %s17 = sshll.u32 %s0, 4
      %s18 = int_to_ptr.hbm [resolvable:$true] %s17
      %s19 = sshll.u32 [#allocation2], 4
      %s20 = int_to_ptr.vmem [resolvable:$true] %s19
      %25 = dma.hbm_to_vmem [thread:$0]  %s18, 256, %s20, [#allocation3], 128, 128, 8
    $region5: #{tpu_custom_call.1} parent=1 // pred_fallthru
      _
    // Predicated region
    $region6: #{tpu_custom_call.1} parent=1 // pred_check
      _
    $region7: #{tpu_custom_call.1} parent=1 // pred_check_branch
      %27 = sbr.rel (0) target = $region9
    $region8: #{tpu_custom_call.1} parent=1 // pred_region
      %29 = vsyncadd [#allocation6], 0
      %s30 = sshll.u32 %s1, 4
      %s31 = int_to_ptr.hbm [resolvable:$true] %s30
      %s32 = sshll.u32 [#allocation5], 4
      %s33 = int_to_ptr.vmem [resolvable:$true] %s32
      %38 = dma.hbm_to_vmem [thread:$0]  %s31, 1024, %s33, [#allocation6], 64, 64, 4
    $region9: #{tpu_custom_call.1} parent=1 // pred_fallthru
      _
    // Predicated region
    $region10: #{tpu_custom_call.1} parent=1 // pred_check
      _
    $region11: #{tpu_custom_call.1} parent=1 // pred_check_branch
      %40 = sbr.rel (0) target = $region13
    $region12: #{tpu_custom_call.1} parent=1 // pred_region
      _
    $region13: #{tpu_custom_call.1} parent=1 // pred_fallthru
      _
    // Predicated region
    $region14: #{tpu_custom_call.1} parent=1 // pred_check
      _
    $region15: #{tpu_custom_call.1} parent=1 // pred_check_branch
      %42 = sbr.rel (0) target = $region17
    $region16: #{tpu_custom_call.1} parent=1 // pred_region
      %44 = vsyncadd [#allocation6], 0
      %s45 = sshll.u32 %s3, 4
      %s46 = int_to_ptr.hbm [resolvable:$true] %s45
      %s47 = sshll.u32 [#allocation7], 4
      %s48 = int_to_ptr.vmem [resolvable:$true] %s47
      %53 = dma.hbm_to_vmem [thread:$0]  %s46, 1024, %s48, [#allocation6], 64, 64, 4
    $region17: #{tpu_custom_call.1} parent=1 // pred_fallthru
      _
    // Predicated region
    $region18: #{tpu_custom_call.1} parent=1 // pred_check
      _
    $region19: #{tpu_custom_call.1} parent=1 // pred_check_branch
      %55 = sbr.rel (0) target = $region21
    $region20: #{tpu_custom_call.1} parent=1 // pred_region
      _
    $region21: #{tpu_custom_call.1} parent=1 // pred_fallthru
      _
    // Predicated region
    $region22: #{tpu_custom_call.1} parent=1 // pred_check
      _
    $region23: #{tpu_custom_call.1} parent=1 // pred_check_branch
      %57 = sbr.rel (0) target = $region25
    $region24: #{tpu_custom_call.1} parent=1 // pred_region
      %59 = dma.done [#allocation3], 256
    $region25: #{tpu_custom_call.1} parent=1 // pred_fallthru
      _
    // Predicated region
    $region26: #{tpu_custom_call.1} parent=1 // pred_check
      _
    $region27: #{tpu_custom_call.1} parent=1 // pred_check_branch
      %61 = sbr.rel (0) target = $region29
    $region28: #{tpu_custom_call.1} parent=1 // pred_region
      %63 = dma.done [#allocation6], 1024
    $region29: #{tpu_custom_call.1} parent=1 // pred_fallthru
      _
    // Predicated region
    $region30: #{tpu_custom_call.1} parent=1 // pred_check
      _
    $region31: #{tpu_custom_call.1} parent=1 // pred_check_branch
      %65 = sbr.rel (0) target = $region33
    $region32: #{tpu_custom_call.1} parent=1 // pred_region
      %67 = dma.done [#allocation6], 1024
    $region33: #{tpu_custom_call.1} parent=1 // pred_fallthru
      _
    %v68 = vld [vmem:[#allocation2] sm:$0xff]
    %v69 = vld [vmem:[#allocation2 + $0x8] sm:$0xff]
    %v70 = vpack.c.bf16 %v69, %v68
    %v71 = vld [vmem:[#allocation5] sm:$0xf]
    %v72 = vld [vmem:[#allocation5 + $0x4] sm:$0xf]
    %v73 = vld [vmem:[#allocation5 + $0x8] sm:$0xf]
    %v74 = vld [vmem:[#allocation5 + $0xc] sm:$0xf]
    %v75 = vld [vmem:[#allocation5 + $0x10] sm:$0xf]
    %v76 = vld [vmem:[#allocation5 + $0x14] sm:$0xf]
    %v77 = vld [vmem:[#allocation5 + $0x18] sm:$0xf]
    %v78 = vld [vmem:[#allocation5 + $0x1c] sm:$0xf]
    %v79 = vld [vmem:[#allocation5 + $0x20] sm:$0xf]
    %v80 = vld [vmem:[#allocation5 + $0x24] sm:$0xf]
    %v81 = vld [vmem:[#allocation5 + $0x28] sm:$0xf]
    %v82 = vld [vmem:[#allocation5 + $0x2c] sm:$0xf]
    %v83 = vld [vmem:[#allocation5 + $0x30] sm:$0xf]
    %v84 = vld [vmem:[#allocation5 + $0x34] sm:$0xf]
    %v85 = vld [vmem:[#allocation5 + $0x38] sm:$0xf]
    %v86 = vld [vmem:[#allocation5 + $0x3c] sm:$0xf]
    %v87 = vld [vmem:[%s2] sm:$0x1]
    %v89 = vperm.slane %v87, 0
    %v107 = vunpack.c.l.b16 %v71
    %v108 = vunpack.c.l.b16 %v72
    %v109 = vunpack.c.l.b16 %v73
    %v110 = vunpack.c.l.b16 %v74
    %v111 = vunpack.c.l.b16 %v75
    %v112 = vunpack.c.l.b16 %v76
    %v113 = vunpack.c.l.b16 %v77
    %v114 = vunpack.c.l.b16 %v78
    %v115 = vunpack.c.l.b16 %v79
    %v116 = vunpack.c.l.b16 %v80
    %v117 = vunpack.c.l.b16 %v81
    %v118 = vunpack.c.l.b16 %v82
    %v119 = vunpack.c.l.b16 %v83
    %v120 = vunpack.c.l.b16 %v84
    %v121 = vunpack.c.l.b16 %v85
    %v122 = vunpack.c.l.b16 %v86
    %v123 = vpack.c.b16 %v108, %v107
    %v124 = vpack.c.b16 %v110, %v109
    %v125 = vpack.c.b16 %v112, %v111
    %v126 = vpack.c.b16 %v114, %v113
    %v127 = vpack.c.b16 %v116, %v115
    %v128 = vpack.c.b16 %v118, %v117
    %v129 = vpack.c.b16 %v120, %v119
    %v130 = vpack.c.b16 %v122, %v121
    %139 = vmatpush.bf16.msra.mxu0 %v130
    %140 = vmatpush.bf16.msra.mxu0 %v129
    %141 = vmatpush.bf16.msra.mxu0 %v128
    %142 = vmatpush.bf16.msra.mxu0 %v127
    %143 = vmatpush.bf16.msra.mxu0 %v126
    %144 = vmatpush.bf16.msra.mxu0 %v125
    %145 = vmatpush.bf16.msra.mxu0 %v124
    %146 = vmatpush.bf16.msra.mxu0 %v123
    %147 = vmatmul.bf16.gmra.mxu0 %v70
    %v148 = vpop.f32.mrf.mxu0
    %v149 = vadd.f32 %v89, %v148
    %v150 = vpop.f32.mrf.mxu0
    %v151 = vadd.f32 %v89, %v150
    %152 = vdwg.mxu0
    %v153 = vmul.f32 %v149, 0.5
    %v154 = vmul.f32 %v151, 0.5
    %v155 = vmul.f32 %v149, 0.70710677
    %v156 = vmul.f32 %v151, 0.70710677
    %v157 = vmul.f32 %v155, %v155
    %v158 = vmin.f32 16.0, %v157
    %v159 = vmul.f32 %v158, 2.1237322e-06
    %v160 = vadd.f32 %v159, 0.00028619796
    %v161 = vmul.f32 %v158, %v160
    %v162 = vadd.f32 %v161, 0.0036580483
    %v163 = vmul.f32 %v158, %v162
    %v164 = vadd.f32 %v163, 0.05243302
    %v165 = vmul.f32 %v158, %v164
    %v166 = vadd.f32 %v165, 0.18741608
    %v167 = vmul.f32 %v158, %v166
    %v168 = vadd.f32 %v167, 1.1283791
    %v169 = vmul.f32 %v155, %v168
    %v170 = vmul.f32 %v158, 3.8918573e-05
    %v171 = vadd.f32 %v170, 0.001143296
    %v172 = vmul.f32 %v158, %v171
    %v173 = vadd.f32 %v172, 0.014752088
    %v174 = vmul.f32 %v158, %v173
    %v175 = vadd.f32 %v174, 0.112945676
    %v176 = vmul.f32 %v158, %v175
    %v177 = vadd.f32 %v176, 0.4994258
    %v178 = vmul.f32 %v158, %v177
    %v179 = vadd.f32 %v178, 1.0
    %v180 = vrcp.pop %v179
    %v181 = vmul.f32 %v179, %v180
    %v182 = vsub.f32 1.0, %v181
    %v183 = vmul.f32 %v180, %v182
    %v184 = vadd.f32 %v180, %v183
    %vm185 = vweird.f32 %v179
    %vm186 = vweird.f32 %v180
    %vm187 = vmor %vm185, %vm186
    %v188 = vsel %vm187, %v180, %v184
    %v189 = vand.u32 2147483647, %v179
    %vm190 = vcmp.eq.f32.partialorder %v189, 8.507059e+37
    %v191 = vand.u32 %v179, 2147483648
    %v192 = vor.u32 1.1754944e-38, %v191
    %v193 = vsel %vm190, %v192, %v188
    %v194 = vmul.f32 %v169, %v193
    %v195 = vmin.f32 %v194, 1.0
    %v196 = vmax.f32 %v195, -1.0
    %v197 = vmul.f32 %v156, %v156
    %v198 = vmin.f32 16.0, %v197
    %v199 = vmul.f32 %v198, 2.1237322e-06
    %v200 = vadd.f32 %v199, 0.00028619796
    %v201 = vmul.f32 %v198, %v200
    %v202 = vadd.f32 %v201, 0.0036580483
    %v203 = vmul.f32 %v198, %v202
    %v204 = vadd.f32 %v203, 0.05243302
    %v205 = vmul.f32 %v198, %v204
    %v206 = vadd.f32 %v205, 0.18741608
    %v207 = vmul.f32 %v198, %v206
    %v208 = vadd.f32 %v207, 1.1283791
    %v209 = vmul.f32 %v156, %v208
    %v210 = vmul.f32 %v198, 3.8918573e-05
    %v211 = vadd.f32 %v210, 0.001143296
    %v212 = vmul.f32 %v198, %v211
    %v213 = vadd.f32 %v212, 0.014752088
    %v214 = vmul.f32 %v198, %v213
    %v215 = vadd.f32 %v214, 0.112945676
    %v216 = vmul.f32 %v198, %v215
    %v217 = vadd.f32 %v216, 0.4994258
    %v218 = vmul.f32 %v198, %v217
    %v219 = vadd.f32 %v218, 1.0
    %v220 = vrcp.pop %v219
    %v221 = vmul.f32 %v219, %v220
    %v222 = vsub.f32 1.0, %v221
    %v223 = vmul.f32 %v220, %v222
    %v224 = vadd.f32 %v220, %v223
    %vm225 = vweird.f32 %v219
    %vm226 = vweird.f32 %v220
    %vm227 = vmor %vm225, %vm226
    %v228 = vsel %vm227, %v220, %v224
    %v229 = vand.u32 2147483647, %v219
    %vm230 = vcmp.eq.f32.partialorder %v229, 8.507059e+37
    %v231 = vand.u32 %v219, 2147483648
    %v232 = vor.u32 1.1754944e-38, %v231
    %v233 = vsel %vm230, %v232, %v228
    %v234 = vmul.f32 %v209, %v233
    %v235 = vmin.f32 %v234, 1.0
    %v236 = vmax.f32 %v235, -1.0
    %v237 = vadd.f32 %v196, 1.0
    %v238 = vadd.f32 %v236, 1.0
    %v239 = vmul.f32 %v153, %v237
    %v240 = vmul.f32 %v154, %v238
    %v241 = vpack.c.bf16 %v240, %v239
    %v242 = vld [vmem:[#allocation7] sm:$0xf]
    %v243 = vld [vmem:[#allocation7 + $0x4] sm:$0xf]
    %v244 = vld [vmem:[#allocation7 + $0x8] sm:$0xf]
    %v245 = vld [vmem:[#allocation7 + $0xc] sm:$0xf]
    %v246 = vld [vmem:[#allocation7 + $0x10] sm:$0xf]
    %v247 = vld [vmem:[#allocation7 + $0x14] sm:$0xf]
    %v248 = vld [vmem:[#allocation7 + $0x18] sm:$0xf]
    %v249 = vld [vmem:[#allocation7 + $0x1c] sm:$0xf]
    %v250 = vld [vmem:[#allocation7 + $0x20] sm:$0xf]
    %v251 = vld [vmem:[#allocation7 + $0x24] sm:$0xf]
    %v252 = vld [vmem:[#allocation7 + $0x28] sm:$0xf]
    %v253 = vld [vmem:[#allocation7 + $0x2c] sm:$0xf]
    %v254 = vld [vmem:[#allocation7 + $0x30] sm:$0xf]
    %v255 = vld [vmem:[#allocation7 + $0x34] sm:$0xf]
    %v256 = vld [vmem:[#allocation7 + $0x38] sm:$0xf]
    %v257 = vld [vmem:[#allocation7 + $0x3c] sm:$0xf]
    %v258 = vld [vmem:[%s4] sm:$0x1]
    %v260 = vperm.slane %v258, 0
    %v278 = vunpack.c.l.b16 %v242
    %v279 = vunpack.c.l.b16 %v243
    %v280 = vunpack.c.l.b16 %v244
    %v281 = vunpack.c.l.b16 %v245
    %v282 = vunpack.c.l.b16 %v246
    %v283 = vunpack.c.l.b16 %v247
    %v284 = vunpack.c.l.b16 %v248
    %v285 = vunpack.c.l.b16 %v249
    %v286 = vunpack.c.l.b16 %v250
    %v287 = vunpack.c.l.b16 %v251
    %v288 = vunpack.c.l.b16 %v252
    %v289 = vunpack.c.l.b16 %v253
    %v290 = vunpack.c.l.b16 %v254
    %v291 = vunpack.c.l.b16 %v255
    %v292 = vunpack.c.l.b16 %v256
    %v293 = vunpack.c.l.b16 %v257
    %v294 = vpack.c.b16 %v279, %v278
    %v295 = vpack.c.b16 %v281, %v280
    %v296 = vpack.c.b16 %v283, %v282
    %v297 = vpack.c.b16 %v285, %v284
    %v298 = vpack.c.b16 %v287, %v286
    %v299 = vpack.c.b16 %v289, %v288
    %v300 = vpack.c.b16 %v291, %v290
    %v301 = vpack.c.b16 %v293, %v292
    %310 = vmatpush.bf16.msra.mxu0 %v301
    %311 = vmatpush.bf16.msra.mxu0 %v300
    %312 = vmatpush.bf16.msra.mxu0 %v299
    %313 = vmatpush.bf16.msra.mxu0 %v298
    %314 = vmatpush.bf16.msra.mxu0 %v297
    %315 = vmatpush.bf16.msra.mxu0 %v296
    %316 = vmatpush.bf16.msra.mxu0 %v295
    %317 = vmatpush.bf16.msra.mxu0 %v294
    %318 = vmatmul.bf16.gmra.mxu0 %v241
    %v319 = vpop.f32.mrf.mxu0
    %v320 = vadd.f32 %v260, %v319
    %v321 = vpop.f32.mrf.mxu0
    %v322 = vadd.f32 %v260, %v321
    %323 = vdwg.mxu0
    %324 = vst [vmem:[#allocation8] sm:$0xff] %v320
    %325 = vst [vmem:[#allocation8 + $0x8] sm:$0xff] %v322
    // Predicated region
    $region34: #{tpu_custom_call.1} parent=1 // pred_check
      _
    $region35: #{tpu_custom_call.1} parent=1 // pred_check_branch
      %327 = sbr.rel (0) target = $region37
    $region36: #{tpu_custom_call.1} parent=1 // pred_region
      %329 = vsyncadd [#allocation4], 0
      %s330 = sshll.u32 [#allocation8], 4
      %s331 = int_to_ptr.vmem [resolvable:$true] %s330
      %s332 = sshll.u32 %s5, 4
      %s333 = int_to_ptr.hbm [resolvable:$true] %s332
      %338 = dma.vmem_to_hbm [thread:$0]  %s331, 256, %s333, [#allocation4], 128, 128, 8
    $region37: #{tpu_custom_call.1} parent=1 // pred_fallthru
      _
    // Predicated region
    $region38: #{tpu_custom_call.1} parent=1 // pred_check
      _
    $region39: #{tpu_custom_call.1} parent=1 // pred_check_branch
      %340 = sbr.rel (0) target = $region41
    $region40: #{tpu_custom_call.1} parent=1 // pred_region
      %342 = dma.done [#allocation4], 256
    $region41: #{tpu_custom_call.1} parent=1 // pred_fallthru
      _
    %343 = vsyncpa [#allocation3], 1
    %344 = vsyncpa [#allocation6], 1
    %345 = vsyncpa [#allocation4], 1

// kernel: tpu_custom_call.1
$region0: #{tpu_custom_call.1}
  #allocation0 [shape = 'u32[]', space=smem, size = 0x4, offset = 0x4, fixed_abs, tag = 'smem constant byte address 0x4 - core index']
  #allocation1 [shape = 'u32[72,128]{1,0:T(1,128)}', space=vmem, size = 0x9000, scoped, tag = 'internal scratch']
  %s0 = inlined_call_operand.hbm [shape: f32[16,128], index: 0, kind: input, shape index: {}]
  %s1 = inlined_call_operand.hbm [shape: bf16[128,128], index: 1, kind: input, shape index: {}]
  %s2 = inlined_call_operand.vmem [shape: f32[1,128], index: 2, kind: input, shape index: {}]
  %s3 = inlined_call_operand.hbm [shape: bf16[128,128], index: 3, kind: input, shape index: {}]
  %s4 = inlined_call_operand.vmem [shape: f32[1,128], index: 4, kind: input, shape index: {}]
  %s5 = inlined_call_operand.hbm [shape: f32[16,128], index: 5, kind: output, shape index: {}]
  %s6 = sld [smem:[#allocation0]]
  $region42: #{tpu_custom_call.1} parent=0
    _
  %s8 = ssub.s32 1, %s6
  %s9 = scalar_select 0, %s8, %s6
  $region1: #{tpu_custom_call.1} parent=0
    #allocation2 [shape = 'u8[8192]{0}', space=vmem, size = 0x2000, scoped, tag = 'input window, operand 0, single buffered']
    #allocation3 [shape = 's32[1]{0}', space=sflag, size = 0x4, scoped, tag = 'scoped memory for tpu_custom_call.1']
    #allocation4 [shape = 's32[1]{0}', space=sflag, size = 0x4, scoped, tag = 'scoped memory for tpu_custom_call.1']
    #allocation5 [shape = 'u8[32768]{0}', space=vmem, size = 0x8000, scoped, tag = 'input window, operand 1, single buffered']
    #allocation6 [shape = 's32[1]{0}', space=sflag, size = 0x4, scoped, tag = 'scoped memory for tpu_custom_call.1']
    #allocation7 [shape = 'u8[32768]{0}', space=vmem, size = 0x8000, scoped, tag = 'input window, operand 3, single buffered']
    #allocation8 [shape = 'u8[8192]{0}', space=vmem, size = 0x2000, scoped, tag = 'output window, operand 0, single buffered']
    %10 = vsyncpa [#allocation3], 0
    %11 = vsyncpa [#allocation6], 0
    %12 = vsyncpa [#allocation4], 0
    // Predicated region
    $region2: #{tpu_custom_call.1} parent=1 // pred_check
      _
    $region3: #{tpu_custom_call.1} parent=1 // pred_check_branch
      %14 = sbr.rel (0) target = $region5
    $region4: #{tpu_custom_call.1} parent=1 // pred_region
      %16 = vsyncadd [#allocation3], 0
      %s17 = sshll.u32 %s0, 4
      %s18 = int_to_ptr.hbm [resolvable:$true] %s17
      %s19 = sshll.u32 [#allocation2], 4
      %s20 = int_to_ptr.vmem [resolvable:$true] %s19
      %25 = dma.hbm_to_vmem [thread:$0]  %s18, 256, %s20, [#allocation3], 128, 128, 8
    $region5: #{tpu_custom_call.1} parent=1 // pred_fallthru
      _
    // Predicated region
    $region6: #{tpu_custom_call.1} parent=1 // pred_check
      _
    $region7: #{tpu_custom_call.1} parent=1 // pred_check_branch
      %27 = sbr.rel (0) target = $region9
    $region8: #{tpu_custom_call.1} parent=1 // pred_region
      %29 = vsyncadd [#allocation6], 0
      %s30 = sshll.u32 %s1, 4
      %s31 = int_to_ptr.hbm [resolvable:$true] %s30
      %s32 = sshll.u32 [#allocation5], 4
      %s33 = int_to_ptr.vmem [resolvable:$true] %s32
      %38 = dma.hbm_to_vmem [thread:$0]  %s31, 1024, %s33, [#allocation6], 64, 64, 4
    $region9: #{tpu_custom_call.1} parent=1 // pred_fallthru
      _
    // Predicated region
    $region10: #{tpu_custom_call.1} parent=1 // pred_check
      _
    $region11: #{tpu_custom_call.1} parent=1 // pred_check_branch
      %40 = sbr.rel (0) target = $region13
    $region12: #{tpu_custom_call.1} parent=1 // pred_region
      _
    $region13: #{tpu_custom_call.1} parent=1 // pred_fallthru
      _
    // Predicated region
    $region14: #{tpu_custom_call.1} parent=1 // pred_check
      _
    $region15: #{tpu_custom_call.1} parent=1 // pred_check_branch
      %42 = sbr.rel (0) target = $region17
    $region16: #{tpu_custom_call.1} parent=1 // pred_region
      %44 = vsyncadd [#allocation6], 0
      %s45 = sshll.u32 %s3, 4
      %s46 = int_to_ptr.hbm [resolvable:$true] %s45
      %s47 = sshll.u32 [#allocation7], 4
      %s48 = int_to_ptr.vmem [resolvable:$true] %s47
      %53 = dma.hbm_to_vmem [thread:$0]  %s46, 1024, %s48, [#allocation6], 64, 64, 4
    $region17: #{tpu_custom_call.1} parent=1 // pred_fallthru
      _
    // Predicated region
    $region18: #{tpu_custom_call.1} parent=1 // pred_check
      _
    $region19: #{tpu_custom_call.1} parent=1 // pred_check_branch
      %55 = sbr.rel (0) target = $region21
    $region20: #{tpu_custom_call.1} parent=1 // pred_region
      _
    $region21: #{tpu_custom_call.1} parent=1 // pred_fallthru
      _
    // Predicated region
    $region22: #{tpu_custom_call.1} parent=1 // pred_check
      _
    $region23: #{tpu_custom_call.1} parent=1 // pred_check_branch
      %57 = sbr.rel (0) target = $region25
    $region24: #{tpu_custom_call.1} parent=1 // pred_region
      %59 = dma.done [#allocation3], 256
    $region25: #{tpu_custom_call.1} parent=1 // pred_fallthru
      _
    // Predicated region
    $region26: #{tpu_custom_call.1} parent=1 // pred_check
      _
    $region27: #{tpu_custom_call.1} parent=1 // pred_check_branch
      %61 = sbr.rel (0) target = $region29
    $region28: #{tpu_custom_call.1} parent=1 // pred_region
      %63 = dma.done [#allocation6], 1024
    $region29: #{tpu_custom_call.1} parent=1 // pred_fallthru
      _
    // Predicated region
    $region30: #{tpu_custom_call.1} parent=1 // pred_check
      _
    $region31: #{tpu_custom_call.1} parent=1 // pred_check_branch
      %65 = sbr.rel (0) target = $region33
    $region32: #{tpu_custom_call.1} parent=1 // pred_region
      %67 = dma.done [#allocation6], 1024
    $region33: #{tpu_custom_call.1} parent=1 // pred_fallthru
      _
    %v68 = vld [vmem:[#allocation2] sm:$0xff]
    %v69 = vld [vmem:[#allocation2 + $0x8] sm:$0xff]
    %v70 = vpack.c.bf16 %v69, %v68
    %v71 = vld [vmem:[#allocation5] sm:$0xf]
    %v72 = vld [vmem:[#allocation5 + $0x4] sm:$0xf]
    %v73 = vld [vmem:[#allocation5 + $0x8] sm:$0xf]
    %v74 = vld [vmem:[#allocation5 + $0xc] sm:$0xf]
    %v75 = vld [vmem:[#allocation5 + $0x10] sm:$0xf]
    %v76 = vld [vmem:[#allocation5 + $0x14] sm:$0xf]
    %v77 = vld [vmem:[#allocation5 + $0x18] sm:$0xf]
    %v78 = vld [vmem:[#allocation5 + $0x1c] sm:$0xf]
    %v79 = vld [vmem:[#allocation5 + $0x20] sm:$0xf]
    %v80 = vld [vmem:[#allocation5 + $0x24] sm:$0xf]
    %v81 = vld [vmem:[#allocation5 + $0x28] sm:$0xf]
    %v82 = vld [vmem:[#allocation5 + $0x2c] sm:$0xf]
    %v83 = vld [vmem:[#allocation5 + $0x30] sm:$0xf]
    %v84 = vld [vmem:[#allocation5 + $0x34] sm:$0xf]
    %v85 = vld [vmem:[#allocation5 + $0x38] sm:$0xf]
    %v86 = vld [vmem:[#allocation5 + $0x3c] sm:$0xf]
    %v87 = vld [vmem:[%s2] sm:$0x1]
    %v89 = vperm.slane %v87, 0
    %v107 = vunpack.c.l.b16 %v71
    %v108 = vunpack.c.l.b16 %v72
    %v109 = vunpack.c.l.b16 %v73
    %v110 = vunpack.c.l.b16 %v74
    %v111 = vunpack.c.l.b16 %v75
    %v112 = vunpack.c.l.b16 %v76
    %v113 = vunpack.c.l.b16 %v77
    %v114 = vunpack.c.l.b16 %v78
    %v115 = vunpack.c.l.b16 %v79
    %v116 = vunpack.c.l.b16 %v80
    %v117 = vunpack.c.l.b16 %v81
    %v118 = vunpack.c.l.b16 %v82
    %v119 = vunpack.c.l.b16 %v83
    %v120 = vunpack.c.l.b16 %v84
    %v121 = vunpack.c.l.b16 %v85
    %v122 = vunpack.c.l.b16 %v86
    %v123 = vpack.c.b16 %v108, %v107
    %v124 = vpack.c.b16 %v110, %v109
    %v125 = vpack.c.b16 %v112, %v111
    %v126 = vpack.c.b16 %v114, %v113
    %v127 = vpack.c.b16 %v116, %v115
    %v128 = vpack.c.b16 %v118, %v117
    %v129 = vpack.c.b16 %v120, %v119
    %v130 = vpack.c.b16 %v122, %v121
    %139 = vmatpush.bf16.msra.mxu0 %v130
    %140 = vmatpush.bf16.msra.mxu0 %v129
    %141 = vmatpush.bf16.msra.mxu0 %v128
    %142 = vmatpush.bf16.msra.mxu0 %v127
    %143 = vmatpush.bf16.msra.mxu0 %v126
    %144 = vmatpush.bf16.msra.mxu0 %v125
    %145 = vmatpush.bf16.msra.mxu0 %v124
    %146 = vmatpush.bf16.msra.mxu0 %v123
    %147 = vmatmul.bf16.gmra.mxu0 %v70
    %v148 = vpop.f32.mrf.mxu0
    %v149 = vadd.f32 %v89, %v148
    %v150 = vpop.f32.mrf.mxu0
    %v151 = vadd.f32 %v89, %v150
    %152 = vdwg.mxu0
    %v153 = vmul.f32 %v149, 0.5
    %v154 = vmul.f32 %v151, 0.5
    %v155 = vmul.f32 %v149, 0.70710677
    %v156 = vmul.f32 %v151, 0.70710677
    %v157 = vmul.f32 %v155, %v155
    %v158 = vmin.f32 16.0, %v157
    %v159 = vmul.f32 %v158, 2.1237322e-06
    %v160 = vadd.f32 %v159, 0.00028619796
    %v161 = vmul.f32 %v158, %v160
    %v162 = vadd.f32 %v161, 0.0036580483
    %v163 = vmul.f32 %v158, %v162
    %v164 = vadd.f32 %v163, 0.05243302
    %v165 = vmul.f32 %v158, %v164
    %v166 = vadd.f32 %v165, 0.18741608
    %v167 = vmul.f32 %v158, %v166
    %v168 = vadd.f32 %v167, 1.1283791
    %v169 = vmul.f32 %v155, %v168
    %v170 = vmul.f32 %v158, 3.8918573e-05
    %v171 = vadd.f32 %v170, 0.001143296
    %v172 = vmul.f32 %v158, %v171
    %v173 = vadd.f32 %v172, 0.014752088
    %v174 = vmul.f32 %v158, %v173
    %v175 = vadd.f32 %v174, 0.112945676
    %v176 = vmul.f32 %v158, %v175
    %v177 = vadd.f32 %v176, 0.4994258
    %v178 = vmul.f32 %v158, %v177
    %v179 = vadd.f32 %v178, 1.0
    %v180 = vrcp.pop %v179
    %v181 = vmul.f32 %v179, %v180
    %v182 = vsub.f32 1.0, %v181
    %v183 = vmul.f32 %v180, %v182
    %v184 = vadd.f32 %v180, %v183
    %vm185 = vweird.f32 %v179
    %vm186 = vweird.f32 %v180
    %vm187 = vmor %vm185, %vm186
    %v188 = vsel %vm187, %v180, %v184
    %v189 = vand.u32 2147483647, %v179
    %vm190 = vcmp.eq.f32.partialorder %v189, 8.507059e+37
    %v191 = vand.u32 %v179, 2147483648
    %v192 = vor.u32 1.1754944e-38, %v191
    %v193 = vsel %vm190, %v192, %v188
    %v194 = vmul.f32 %v169, %v193
    %v195 = vmin.f32 %v194, 1.0
    %v196 = vmax.f32 %v195, -1.0
    %v197 = vmul.f32 %v156, %v156
    %v198 = vmin.f32 16.0, %v197
    %v199 = vmul.f32 %v198, 2.1237322e-06
    %v200 = vadd.f32 %v199, 0.00028619796
    %v201 = vmul.f32 %v198, %v200
    %v202 = vadd.f32 %v201, 0.0036580483
    %v203 = vmul.f32 %v198, %v202
    %v204 = vadd.f32 %v203, 0.05243302
    %v205 = vmul.f32 %v198, %v204
    %v206 = vadd.f32 %v205, 0.18741608
    %v207 = vmul.f32 %v198, %v206
    %v208 = vadd.f32 %v207, 1.1283791
    %v209 = vmul.f32 %v156, %v208
    %v210 = vmul.f32 %v198, 3.8918573e-05
    %v211 = vadd.f32 %v210, 0.001143296
    %v212 = vmul.f32 %v198, %v211
    %v213 = vadd.f32 %v212, 0.014752088
    %v214 = vmul.f32 %v198, %v213
    %v215 = vadd.f32 %v214, 0.112945676
    %v216 = vmul.f32 %v198, %v215
    %v217 = vadd.f32 %v216, 0.4994258
    %v218 = vmul.f32 %v198, %v217
    %v219 = vadd.f32 %v218, 1.0
    %v220 = vrcp.pop %v219
    %v221 = vmul.f32 %v219, %v220
    %v222 = vsub.f32 1.0, %v221
    %v223 = vmul.f32 %v220, %v222
    %v224 = vadd.f32 %v220, %v223
    %vm225 = vweird.f32 %v219
    %vm226 = vweird.f32 %v220
    %vm227 = vmor %vm225, %vm226
    %v228 = vsel %vm227, %v220, %v224
    %v229 = vand.u32 2147483647, %v219
    %vm230 = vcmp.eq.f32.partialorder %v229, 8.507059e+37
    %v231 = vand.u32 %v219, 2147483648
    %v232 = vor.u32 1.1754944e-38, %v231
    %v233 = vsel %vm230, %v232, %v228
    %v234 = vmul.f32 %v209, %v233
    %v235 = vmin.f32 %v234, 1.0
    %v236 = vmax.f32 %v235, -1.0
    %v237 = vadd.f32 %v196, 1.0
    %v238 = vadd.f32 %v236, 1.0
    %v239 = vmul.f32 %v153, %v237
    %v240 = vmul.f32 %v154, %v238
    %v241 = vpack.c.bf16 %v240, %v239
    %v242 = vld [vmem:[#allocation7] sm:$0xf]
    %v243 = vld [vmem:[#allocation7 + $0x4] sm:$0xf]
    %v244 = vld [vmem:[#allocation7 + $0x8] sm:$0xf]
    %v245 = vld [vmem:[#allocation7 + $0xc] sm:$0xf]
    %v246 = vld [vmem:[#allocation7 + $0x10] sm:$0xf]
    %v247 = vld [vmem:[#allocation7 + $0x14] sm:$0xf]
    %v248 = vld [vmem:[#allocation7 + $0x18] sm:$0xf]
    %v249 = vld [vmem:[#allocation7 + $0x1c] sm:$0xf]
    %v250 = vld [vmem:[#allocation7 + $0x20] sm:$0xf]
    %v251 = vld [vmem:[#allocation7 + $0x24] sm:$0xf]
    %v252 = vld [vmem:[#allocation7 + $0x28] sm:$0xf]
    %v253 = vld [vmem:[#allocation7 + $0x2c] sm:$0xf]
    %v254 = vld [vmem:[#allocation7 + $0x30] sm:$0xf]
    %v255 = vld [vmem:[#allocation7 + $0x34] sm:$0xf]
    %v256 = vld [vmem:[#allocation7 + $0x38] sm:$0xf]
    %v257 = vld [vmem:[#allocation7 + $0x3c] sm:$0xf]
    %v258 = vld [vmem:[%s4] sm:$0x1]
    %v260 = vperm.slane %v258, 0
    %v278 = vunpack.c.l.b16 %v242
    %v279 = vunpack.c.l.b16 %v243
    %v280 = vunpack.c.l.b16 %v244
    %v281 = vunpack.c.l.b16 %v245
    %v282 = vunpack.c.l.b16 %v246
    %v283 = vunpack.c.l.b16 %v247
    %v284 = vunpack.c.l.b16 %v248
    %v285 = vunpack.c.l.b16 %v249
    %v286 = vunpack.c.l.b16 %v250
    %v287 = vunpack.c.l.b16 %v251
    %v288 = vunpack.c.l.b16 %v252
    %v289 = vunpack.c.l.b16 %v253
    %v290 = vunpack.c.l.b16 %v254
    %v291 = vunpack.c.l.b16 %v255
    %v292 = vunpack.c.l.b16 %v256
    %v293 = vunpack.c.l.b16 %v257
    %v294 = vpack.c.b16 %v279, %v278
    %v295 = vpack.c.b16 %v281, %v280
    %v296 = vpack.c.b16 %v283, %v282
    %v297 = vpack.c.b16 %v285, %v284
    %v298 = vpack.c.b16 %v287, %v286
    %v299 = vpack.c.b16 %v289, %v288
    %v300 = vpack.c.b16 %v291, %v290
    %v301 = vpack.c.b16 %v293, %v292
    %310 = vmatpush.bf16.msra.mxu0 %v301
    %311 = vmatpush.bf16.msra.mxu0 %v300
    %312 = vmatpush.bf16.msra.mxu0 %v299
    %313 = vmatpush.bf16.msra.mxu0 %v298
    %314 = vmatpush.bf16.msra.mxu0 %v297
    %315 = vmatpush.bf16.msra.mxu0 %v296
    %316 = vmatpush.bf16.msra.mxu0 %v295
    %317 = vmatpush.bf16.msra.mxu0 %v294
    %318 = vmatmul.bf16.gmra.mxu0 %v241
    %v319 = vpop.f32.mrf.mxu0
    %v320 = vadd.f32 %v260, %v319
    %v321 = vpop.f32.mrf.mxu0
    %v322 = vadd.f32 %v260, %v321
    %323 = vdwg.mxu0
    %324 = vst [vmem:[#allocation8] sm:$0xff] %v320
    %325 = vst [vmem:[#allocation8 + $0x8] sm:$0xff] %v322
    // Predicated region
    $region34: #{tpu_custom_call.1} parent=1 // pred_check
      _
    $region35: #{tpu_custom_call.1} parent=1 // pred_check_branch
      %327 = sbr.rel (0) target = $region37
    $region36: #{tpu_custom_call.1} parent=1 // pred_region
      %329 = vsyncadd [#allocation4], 0
      %s330 = sshll.u32 [#allocation8], 4
      %s331 = int_to_ptr.vmem [resolvable:$true] %s330
      %s332 = sshll.u32 %s5, 4
      %s333 = int_to_ptr.hbm [resolvable:$true] %s332
      %338 = dma.vmem_to_hbm [thread:$0]  %s331, 256, %s333, [#allocation4], 128, 128, 8
    $region37: #{tpu_custom_call.1} parent=1 // pred_fallthru
      _
    // Predicated region
    $region38: #{tpu_custom_call.1} parent=1 // pred_check
      _
    $region39: #{tpu_custom_call.1} parent=1 // pred_check_branch
      %340 = sbr.rel (0) target = $region41
    $region40: #{tpu_custom_call.1} parent=1 // pred_region
      %342 = dma.done [#allocation4], 256
    $region41: #{tpu_custom_call.1} parent=1 // pred_fallthru
      _
    %343 = vsyncpa [#allocation3], 1
    %344 = vsyncpa [#allocation6], 1
    %345 = vsyncpa [#allocation4], 1

</llo_original>
